<compile_context>
chip_gen: v5e
topology: v5e:2x2
jax: 0.10.0
libtpu: 0.0.40
codegen_flags: <defaults>
</compile_context>

<pallas_src>
import functools

import jax
import jax.numpy as jnp
from jax.experimental import pallas as pl
from jax.experimental.pallas import tpu as pltpu

_LANE = 128     # vreg lane width  -> feature dims padded to multiples of this
_SUBLANE = 8    # f32 sublane width (16 used when streaming 16-bit activations)


def _round_up(n, m):
    return ((n + m - 1) // m) * m


def _cdiv(a, b):
    return -(-a // b)


def _largest_dividing_tile(total, target, align=_LANE):
    """Largest multiple of `align` that divides `total` and is <= max(target, align)."""
    best = align
    t = align
    limit = max(min(total, target), align)
    while t <= limit:
        if total % t == 0:
            best = t
        t += align
    return best


def _softplus(h):
    # Exact softplus (beta=1): max(h,0) + log1p(exp(-|h|)); one exp + one log1p
    # per element, both on the EUP slot (free next to MXU/VPU work).
    return jnp.maximum(h, 0.0) + jnp.log1p(jnp.exp(-jnp.abs(h)))


# --------------------------------------------------------------------------
# Kernels
# --------------------------------------------------------------------------
def dnn_kernel_resident(x_ref, w1t_ref, b1_ref, w2t_ref, b2_ref, o_ref, *,
                        compute_dtype):
    """One (TB, .) batch tile with all weights VMEM-resident.

    Weights arrive pre-transposed (w1t = W1^T (Dp,Hp), w2t = W2^T (Hp,Dop)),
    so both matmuls are canonical (M,K)x(K,N) MXU contractions.
    """
    x = x_ref[...]
    x_c = x if x.dtype == compute_dtype else x.astype(compute_dtype)   # single downcast
    x_f32 = x if x.dtype == jnp.float32 else x.astype(jnp.float32)     # residual stays f32

    h = jnp.dot(x_c, w1t_ref[...], preferred_element_type=jnp.float32) + b1_ref[...]
    z = _softplus(h) + x_f32                       # residual (requires H == D_in)
    y = jnp.dot(z.astype(compute_dtype), w2t_ref[...],
                preferred_element_type=jnp.float32) + b2_ref[...]
    o_ref[...] = y.astype(o_ref.dtype)


def dnn_kernel_htiled(x_ref, w1t_ref, b1_ref, w2t_ref, b2_ref, o_ref, acc_ref, *,
                      compute_dtype):
    """Hidden-dimension-tiled variant for weights too large to keep resident
    (e.g. v7x's 64 MiB VMEM/TC): grid = (batch blocks, hidden blocks), f32
    accumulator in scratch, init/finalize gated with pl.when."""
    k = pl.program_id(1)
    th = w1t_ref.shape[1]                          # static hidden tile width

    @pl.when(k == 0)
    def _init():
        acc_ref[...] = jnp.zeros_like(acc_ref)

    x = x_ref[...]
    x_c = x if x.dtype == compute_dtype else x.astype(compute_dtype)

    # fc1 for this hidden tile: (TB, Dp) x (Dp, TH)
    h = jnp.dot(x_c, w1t_ref[...], preferred_element_type=jnp.float32) + b1_ref[...]
    # Residual uses the matching column slice of x (H == D_in, so Hp == Dp).
    x_res = x_ref[:, pl.ds(pl.multiple_of(k * th, th), th)]
    if x_res.dtype != jnp.float32:
        x_res = x_res.astype(jnp.float32)
    z = _softplus(h) + x_res
    # Partial fc2: accumulate (TB, TH) x (TH, Dop) in f32.
    acc_ref[...] += jnp.dot(z.astype(compute_dtype), w2t_ref[...],
                            preferred_element_type=jnp.float32)

    @pl.when(k == pl.num_programs(1) - 1)
    def _finalize():
        o_ref[...] = (acc_ref[...] + b2_ref[...]).astype(o_ref.dtype)


# --------------------------------------------------------------------------
# Wrappers
# --------------------------------------------------------------------------
def prepare_params(w1, b1, w2, b2, *, compute_dtype=jnp.bfloat16):
    """One-time weight preparation (reuse the result across forward calls):
    pad feature dims to lane-dense multiples of 128, cast to the MXU dtype and
    pre-transpose to (in, out) layout. Zero padding keeps logical outputs
    exact: padded hidden columns produce softplus(0)=ln2 but multiply all-zero
    rows of W2^T."""
    H, D_in = w1.shape
    D_out, H2 = w2.shape
    assert H2 == H and b1.shape == (H,) and b2.shape == (D_out,)
    # The residual softplus(fc1(x)) + x requires hidden_size == input_size.
    assert H == D_in, f"hidden_size ({H}) must equal input_size ({D_in})"

    Dp, Hp, Dop = _round_up(D_in, _LANE), _round_up(H, _LANE), _round_up(D_out, _LANE)
    f32 = jnp.float32
    w1t = jnp.zeros((Dp, Hp), compute_dtype).at[:D_in, :H].set(w1.T.astype(compute_dtype))
    w2t = jnp.zeros((Hp, Dop), compute_dtype).at[:H, :D_out].set(w2.T.astype(compute_dtype))
    b1p = jnp.zeros((1, Hp), f32).at[0, :H].set(b1.astype(f32))
    b2p = jnp.zeros((1, Dop), f32).at[0, :D_out].set(b2.astype(f32))
    return w1t, b1p, w2t, b2p


@functools.partial(
    jax.jit,
    static_argnames=("out_features", "block_batch", "block_hidden", "compute_dtype",
                     "activation_dtype", "weight_vmem_budget_mib"))
def generic_dnn(x, w1t, b1p, w2t, b2p, *, out_features, block_batch=512,
                block_hidden=512, compute_dtype=jnp.bfloat16,
                activation_dtype=None, weight_vmem_budget_mib=40):
    """Forward pass. `w1t/b1p/w2t/b2p` come from `prepare_params` (padded,
    cast, pre-transposed, done once). Returns (B, out_features) in x.dtype."""
    B, D_in = x.shape
    Dp, Hp = w1t.shape
    Hp2, Dop = w2t.shape
    assert Hp2 == Hp and b1p.shape == (1, Hp) and b2p.shape == (1, Dop)
    assert D_in <= Dp and out_features <= Dop

    act_dtype = jnp.dtype(x.dtype if activation_dtype is None else activation_dtype)
    out_dtype = jnp.dtype(x.dtype)
    w_item = jnp.dtype(compute_dtype).itemsize
    act_item, out_item = act_dtype.itemsize, out_dtype.itemsize

    # ---- path selection: whole-weight VMEM residency vs. hidden-dim tiling.
    resident_weight_bytes = (Dp * Hp + Hp * Dop) * w_item + (Hp + Dop) * 4
    use_tiled = resident_weight_bytes > weight_vmem_budget_mib * (1 << 20)
    TH = _largest_dividing_tile(Hp, _round_up(block_hidden, _LANE)) if use_tiled else Hp
    n_hid = Hp // TH

    # ---- batch tile: as large as fits (fewer grid steps, full MXU M-dim).
    mult = 16 if act_item == 2 else _SUBLANE

    def vmem_needed(tb):
        act = 2 * tb * Dp * act_item + 2 * tb * Dop * out_item    # double-buffered x/out tiles
        temps = 2 * tb * TH * 4 + tb * Dop * 4                    # rough f32 body intermediates
        if use_tiled:
            w = 2 * (Dp * TH + TH * Dop) * w_item + 2 * TH * 4 + Dop * 4
            return act + temps + w + tb * Dop * 4                 # + accumulator scratch
        return act + temps + resident_weight_bytes

    VMEM_CAP = 56 << 20   # conservative: fits v7x's 64 MiB/TC (plenty on v5e/v6e)
    TB = min(_round_up(block_batch, mult), _round_up(B, mult))
    while TB > mult and vmem_needed(TB) > VMEM_CAP:
        TB = max(mult, _round_up(TB // 2, mult))
    n_batch = _cdiv(B, TB)
    if n_batch == 1 and B >= 2 * mult:
        # Give both v7x TensorCores a block (neutral when HBM-bound, up to 2x
        # when compute-bound); per-step overhead is only ~0.35 us.
        TB = _round_up(_cdiv(B, 2), mult)
        n_batch = _cdiv(B, TB)
    Bp = n_batch * TB

    # ---- pad / cast activations only when actually required (trace-time if).
    if (Bp != B) or (Dp != D_in) or (act_dtype != x.dtype):
        xp = jnp.zeros((Bp, Dp), act_dtype).at[:B, :D_in].set(x.astype(act_dtype))
    else:
        xp = x

    cost = pl.CostEstimate(
        flops=2 * Bp * (Dp * Hp + Hp * Dop),
        transcendentals=2 * Bp * Hp,             # one exp + one log1p per hidden element
        bytes_accessed=int(Bp * Dp * act_item + resident_weight_bytes
                           + Bp * Dop * out_item),
    )
    compiler_params = pltpu.CompilerParams(
        dimension_semantics=("parallel",) if not use_tiled else ("parallel", "arbitrary"),
        vmem_limit_bytes=int(min(VMEM_CAP, max(32 << 20, vmem_needed(TB) + (8 << 20)))),
    )

    if not use_tiled:
        # Weights fully VMEM-resident (single-buffered), batch pipelined.
        out_p = pl.pallas_call(
            functools.partial(dnn_kernel_resident, compute_dtype=compute_dtype),
            out_shape=jax.ShapeDtypeStruct((Bp, Dop), out_dtype),
            grid=(n_batch,),
            in_specs=[
                pl.BlockSpec((TB, Dp), lambda i: (i, 0)),
                pl.BlockSpec((Dp, Hp), lambda i: (0, 0), pipeline_mode=pl.Buffered(1)),
                pl.BlockSpec((1, Hp), lambda i: (0, 0), pipeline_mode=pl.Buffered(1)),
                pl.BlockSpec((Hp, Dop), lambda i: (0, 0), pipeline_mode=pl.Buffered(1)),
                pl.BlockSpec((1, Dop), lambda i: (0, 0), pipeline_mode=pl.Buffered(1)),
            ],
            out_specs=pl.BlockSpec((TB, Dop), lambda i: (i, 0)),
            compiler_params=compiler_params,
            cost_estimate=cost,
        )(xp, w1t, b1p, w2t, b2p)
    else:
        # Hidden-dim tiled path (v7x VMEM budgeting): streamed weight tiles,
        # f32 accumulator in scratch, bias-2 added at finalize.
        out_p = pl.pallas_call(
            functools.partial(dnn_kernel_htiled, compute_dtype=compute_dtype),
            out_shape=jax.ShapeDtypeStruct((Bp, Dop), out_dtype),
            grid=(n_batch, n_hid),
            in_specs=[
                pl.BlockSpec((TB, Dp), lambda i, k: (i, 0)),
                pl.BlockSpec((Dp, TH), lambda i, k: (0, k)),
                pl.BlockSpec((1, TH), lambda i, k: (0, k)),
                pl.BlockSpec((TH, Dop), lambda i, k: (k, 0)),
                pl.BlockSpec((1, Dop), lambda i, k: (0, 0), pipeline_mode=pl.Buffered(1)),
            ],
            out_specs=pl.BlockSpec((TB, Dop), lambda i, k: (i, 0)),
            scratch_shapes=[pltpu.VMEM((TB, Dop), jnp.float32)],
            compiler_params=compiler_params,
            cost_estimate=cost,
        )(xp, w1t, b1p, w2t, b2p)

    if (Bp != B) or (Dop != out_features):
        out_p = out_p[:B, :out_features]
    return out_p


# --------------------------------------------------------------------------
# Demo / correctness checks
# --------------------------------------------------------------------------
def init_linear_params(key, in_features, out_features):
    """Deterministic init mimicking torch.nn.Linear: U(-1/sqrt(in), 1/sqrt(in))."""
    kw, kb = jax.random.split(key)
    bound = 1.0 / (in_features ** 0.5)
    w = jax.random.uniform(kw, (out_features, in_features), jnp.float32, -bound, bound)
    b = jax.random.uniform(kb, (out_features,), jnp.float32, -bound, bound)
    return w, b


def _reference(x, w1, b1, w2, b2):
    z = jax.nn.softplus(x @ w1.T + b1) + x
    return z @ w2.T + b2


if __name__ == "__main__":
    key = jax.random.PRNGKey(0)

    # --- config 1: small shapes, whole-weight-resident path ---------------
    batch, input_size, hidden_size, output_size = 32, 32, 32, 16
    kx, k1, k2, key = jax.random.split(key, 4)
    x = jax.random.normal(kx, (batch, input_size), jnp.float32)
    w1, b1 = init_linear_params(k1, input_size, hidden_size)
    w2, b2 = init_linear_params(k2, hidden_size, output_size)
    y_ref = _reference(x, w1, b1, w2, b2)

    # f32 MXU path: tight check of padding / batch tiling / residual.
    p32 = prepare_params(w1, b1, w2, b2, compute_dtype=jnp.float32)
    out_f32 = generic_dnn(x, *p32, out_features=output_size, compute_dtype=jnp.float32)
    jax.block_until_ready(out_f32)
    assert out_f32.shape == (batch, output_size)
    assert jnp.allclose(out_f32, y_ref, atol=1e-4, rtol=1e-4), \
        float(jnp.max(jnp.abs(out_f32 - y_ref)))

    # bf16 MXU path (default perf config; documented mixed precision).
    pbf = prepare_params(w1, b1, w2, b2)
    out_bf = generic_dnn(x, *pbf, out_features=output_size)
    jax.block_until_ready(out_bf)
    assert out_bf.shape == (batch, output_size)
    assert jnp.allclose(out_bf, y_ref, atol=5e-2, rtol=5e-2), \
        float(jnp.max(jnp.abs(out_bf - y_ref)))

    # Optional bf16 activation streaming (halves x HBM bytes when mem-bound).
    out_bfa = generic_dnn(x, *pbf, out_features=output_size,
                          activation_dtype=jnp.bfloat16)
    jax.block_until_ready(out_bfa)
    assert jnp.allclose(out_bfa, y_ref, atol=7e-2, rtol=7e-2), \
        float(jnp.max(jnp.abs(out_bfa - y_ref)))

    # --- config 2: exercise the hidden-tiled accumulator path (v7x-style) --
    batch2, feat2, out2 = 64, 256, 128
    kx2, k3, k4 = jax.random.split(key, 3)
    x2 = jax.random.normal(kx2, (batch2, feat2), jnp.float32)
    w1b, b1b = init_linear_params(k3, feat2, feat2)
    w2b, b2b = init_linear_params(k4, feat2, out2)
    y2_ref = _reference(x2, w1b, b1b, w2b, b2b)

    p2 = prepare_params(w1b, b1b, w2b, b2b, compute_dtype=jnp.float32)
    out2_tiled = generic_dnn(x2, *p2, out_features=out2, compute_dtype=jnp.float32,
                             block_hidden=128, weight_vmem_budget_mib=0)
    jax.block_until_ready(out2_tiled)
    assert out2_tiled.shape == (batch2, out2)
    assert jnp.allclose(out2_tiled, y2_ref, atol=1e-3, rtol=1e-3), \
        float(jnp.max(jnp.abs(out2_tiled - y2_ref)))

    print("KERNEL_OK")
</pallas_src>

<mosaic_0001>
module attributes {stable_mosaic.version = 11 : i64} {
  func.func @dnn_kernel_resident(%arg0: i32, %arg1: memref<16x128xf32, #tpu.memory_space<vmem>>, %arg2: memref<128x128xf32, #tpu.memory_space<vmem>>, %arg3: memref<1x128xf32, #tpu.memory_space<vmem>>, %arg4: memref<128x128xf32, #tpu.memory_space<vmem>>, %arg5: memref<1x128xf32, #tpu.memory_space<vmem>>, %arg6: memref<16x128xf32, #tpu.memory_space<vmem>>) attributes {dimension_semantics = [#tpu.dimension_semantics<parallel>], iteration_bounds = array<i64: 2>, scalar_prefetch = 0 : i64, scratch_operands = 0 : i64, tpu.core_type = #tpu.core_type<tc>, window_params = [{transform_indices = @transform_0, window_bounds = array<i64: 16, 128>}, {pipeline_mode = #tpu.pipeline_mode<synchronous>, transform_indices = @transform_1, window_bounds = array<i64: 128, 128>}, {pipeline_mode = #tpu.pipeline_mode<synchronous>, transform_indices = @transform_2, window_bounds = array<i64: 1, 128>}, {pipeline_mode = #tpu.pipeline_mode<synchronous>, transform_indices = @transform_3, window_bounds = array<i64: 128, 128>}, {pipeline_mode = #tpu.pipeline_mode<synchronous>, transform_indices = @transform_4, window_bounds = array<i64: 1, 128>}, {transform_indices = @transform_5, window_bounds = array<i64: 16, 128>}]} {
    %c0 = arith.constant 0 : index
    %c0_0 = arith.constant 0 : index
    %0 = vector.load %arg1[%c0, %c0_0] : memref<16x128xf32, #tpu.memory_space<vmem>>, vector<16x128xf32>
    %c0_1 = arith.constant 0 : index
    %c0_2 = arith.constant 0 : index
    %1 = vector.load %arg2[%c0_1, %c0_2] : memref<128x128xf32, #tpu.memory_space<vmem>>, vector<128x128xf32>
    %cst = arith.constant dense<0.000000e+00> : vector<16x128xf32>
    %2 = tpu.matmul %0, %1, %cst {dimension_numbers = #tpu.dot_dimension_numbers<[1], [0], [0], [1], [0, 0, 1, 1], [], []>} : vector<16x128xf32>, vector<128x128xf32>, vector<16x128xf32> -> vector<16x128xf32>
    %c0_3 = arith.constant 0 : index
    %c0_4 = arith.constant 0 : index
    %3 = vector.load %arg3[%c0_3, %c0_4] : memref<1x128xf32, #tpu.memory_space<vmem>>, vector<1x128xf32>
    %4 = vector.broadcast %3 : vector<1x128xf32> to vector<16x128xf32>
    %5 = arith.addf %2, %4 : vector<16x128xf32>
    %cst_5 = arith.constant 0.000000e+00 : f32
    %6 = vector.broadcast %cst_5 : f32 to vector<16x128xf32>
    %7 = arith.maximumf %5, %6 : vector<16x128xf32>
    %8 = math.absf %5 : vector<16x128xf32>
    %cst_6 = arith.constant 0.000000e+00 : f32
    %9 = vector.broadcast %cst_6 : f32 to vector<16x128xf32>
    %10 = arith.subf %9, %8 : vector<16x128xf32>
    %11 = math.exp %10 : vector<16x128xf32>
    %12 = math.log1p %11 : vector<16x128xf32>
    %13 = arith.addf %7, %12 : vector<16x128xf32>
    %14 = arith.addf %13, %0 : vector<16x128xf32>
    %c0_7 = arith.constant 0 : index
    %c0_8 = arith.constant 0 : index
    %15 = vector.load %arg4[%c0_7, %c0_8] : memref<128x128xf32, #tpu.memory_space<vmem>>, vector<128x128xf32>
    %cst_9 = arith.constant dense<0.000000e+00> : vector<16x128xf32>
    %16 = tpu.matmul %14, %15, %cst_9 {dimension_numbers = #tpu.dot_dimension_numbers<[1], [0], [0], [1], [0, 0, 1, 1], [], []>} : vector<16x128xf32>, vector<128x128xf32>, vector<16x128xf32> -> vector<16x128xf32>
    %c0_10 = arith.constant 0 : index
    %c0_11 = arith.constant 0 : index
    %17 = vector.load %arg5[%c0_10, %c0_11] : memref<1x128xf32, #tpu.memory_space<vmem>>, vector<1x128xf32>
    %18 = vector.broadcast %17 : vector<1x128xf32> to vector<16x128xf32>
    %19 = arith.addf %16, %18 : vector<16x128xf32>
    %c0_12 = arith.constant 0 : index
    %c0_13 = arith.constant 0 : index
    %20 = vector.load %arg6[%c0_12, %c0_13] : memref<16x128xf32, #tpu.memory_space<vmem>>, vector<16x128xf32>
    tpu.vector_store %arg6[%c0_12, %c0_13], %19 {strides = array<i32>} : memref<16x128xf32, #tpu.memory_space<vmem>>, vector<16x128xf32>,
    return
  }
  func.func @transform_0(%arg0: i32) -> (i32, i32) {
    %c0_i32 = arith.constant 0 : i32
    %c0_i32_0 = arith.constant 0 : i32
    return %arg0, %c0_i32 : i32, i32
  }
  func.func @transform_1(%arg0: i32) -> (i32, i32) {
    %c0_i32 = arith.constant 0 : i32
    %c0_i32_0 = arith.constant 0 : i32
    %c0_i32_1 = arith.constant 0 : i32
    return %c0_i32, %c0_i32_0 : i32, i32
  }
  func.func @transform_2(%arg0: i32) -> (i32, i32) {
    %c0_i32 = arith.constant 0 : i32
    %c0_i32_0 = arith.constant 0 : i32
    %c0_i32_1 = arith.constant 0 : i32
    return %c0_i32, %c0_i32_0 : i32, i32
  }
  func.func @transform_3(%arg0: i32) -> (i32, i32) {
    %c0_i32 = arith.constant 0 : i32
    %c0_i32_0 = arith.constant 0 : i32
    %c0_i32_1 = arith.constant 0 : i32
    return %c0_i32, %c0_i32_0 : i32, i32
  }
  func.func @transform_4(%arg0: i32) -> (i32, i32) {
    %c0_i32 = arith.constant 0 : i32
    %c0_i32_0 = arith.constant 0 : i32
    %c0_i32_1 = arith.constant 0 : i32
    return %c0_i32, %c0_i32_0 : i32, i32
  }
  func.func @transform_5(%arg0: i32) -> (i32, i32) {
    %c0_i32 = arith.constant 0 : i32
    %c0_i32_0 = arith.constant 0 : i32
    return %arg0, %c0_i32 : i32, i32
  }
}

</mosaic_0001>

<llo_original>
// kernel: generic_dnn.1
$region0: #{generic_dnn.1}
  #allocation0 [shape = 'u32[]', space=smem, size = 0x4, offset = 0x4, fixed_abs, tag = 'smem constant byte address 0x4 - core index']
  #allocation1 [shape = 'u32[72,128]{1,0:T(1,128)}', space=vmem, size = 0x9000, scoped, tag = 'internal scratch']
  %s0 = inlined_call_operand.vmem [shape: f32[32,128], index: 0, kind: input, shape index: {}]
  %s1 = inlined_call_operand.vmem [shape: f32[128,128], index: 1, kind: input, shape index: {}]
  %s2 = inlined_call_operand.vmem [shape: f32[1,128], index: 2, kind: input, shape index: {}]
  %s3 = inlined_call_operand.hbm [shape: f32[128,128], index: 3, kind: input, shape index: {}]
  %s4 = inlined_call_operand.vmem [shape: f32[1,128], index: 4, kind: input, shape index: {}]
  %s5 = inlined_call_operand.vmem [shape: f32[32,128], index: 5, kind: output, shape index: {}]
  %s6 = sld [smem:[#allocation0]]
  $region57: #{generic_dnn.1} parent=0
    _
  %s8 = ssub.s32 1, %s6
  %s9 = scalar_select 0, %s8, %s6
  $region1: #{generic_dnn.1} parent=0
    #allocation2 [shape = 'u8[65536]{0}', space=vmem, size = 0x10000, scoped, tag = 'input window, operand 3, single buffered']
    #allocation3 [shape = 's32[2]{0}', space=sflag, size = 0x8, scoped, tag = 'scoped memory for generic_dnn.1']
    %10 = vsyncpa [#allocation3], 0
    loop: start=0, step=1, limit=4
    $region2: #{generic_dnn.1} parent=1 // loop_pre_header
      _
    $region3: #{generic_dnn.1} parent=1 // loop_header
      %s12 = sphi 0, %s16
      %p13 = scmp.ge.s32.totalorder %s12, 4
      %s22 = sphi 0, %s24
      %s25 = sphi 0, %s22
      %s26 = sphi 0, %s25
      %s42 = sphi 0, %s26
      %s46 = sphi 0, %s46
      %s48 = sphi 0, %s46
      %s49 = sphi 0, %s48
      %s63 = sphi 0, %s49
      %s67 = sphi 0, %s67
      %s69 = sphi 0, %s67
      %s70 = sphi 0, %s69
      %s84 = sphi 0, %s70
      %s88 = sphi 0, %s88
      %s90 = sphi 0, %s88
      %s91 = sphi 0, %s90
      %s105 = sphi 0, %s91
      %s109 = sphi 0, %s109
      %s111 = sphi 0, %s109
      %s112 = sphi 0, %s111
      %s126 = sphi 0, %s112
      %s132 = sphi 0, %s134
      %s135 = sphi 0, %s132
      %s136 = sphi 0, %s135
      %s152 = sphi 0, %s136
    $region4: #{generic_dnn.1} parent=1 // loop_header_branch
      %15 = sbr.rel (%p13) target = $region8
    $region5: #{generic_dnn.1} parent=1 // loop_body
      %s17 = ssub.s32 %s12, 1
      %s18 = ssub.s32 %s12, 2
      %s19 = sadd.s32 %s12, 1
      %s20 = ssub.s32 %s12, %s19
      %p21 = scmp.eq.s32.totalorder %s20, 0
      %s23 = sadd.s32 %s22, 1
      %s24 = scalar_select %p21, %s22, %s23
      %p27 = pneg %p21
      %p28 = scmp.eq.s32.totalorder %s12, 1
      %p29 = por %p27, %p28
      %p30 = scmp.ne.s32.totalorder %s22, %s25
      %p31 = scmp.eq.s32.totalorder %s12, 0
      %p32 = por %p30, %p31
      %p33 = scmp.ne.s32.totalorder %s22, %s25
      %p34 = scmp.eq.s32.totalorder %s17, 1
      %p35 = por %p33, %p34
      %p36 = scmp.ne.s32.totalorder %s25, %s26
      %p37 = scmp.eq.s32.totalorder %s17, 0
      %p38 = por %p36, %p37
      %p39 = scmp.ne.s32.totalorder %s25, %s26
      %p40 = scmp.eq.s32.totalorder %s18, 1
      %p41 = por %p39, %p40
      %p43 = scmp.ne.s32.totalorder %s26, %s42
      %p44 = scmp.eq.s32.totalorder %s18, 0
      %p45 = por %p43, %p44
      %s47 = sadd.s32 %s46, 1
      %p50 = scmp.eq.s32.totalorder %s12, 1
      %p51 = scmp.ne.s32.totalorder %s46, %s48
      %p52 = scmp.eq.s32.totalorder %s12, 0
      %p53 = por %p51, %p52
      %p54 = scmp.ne.s32.totalorder %s46, %s48
      %p55 = scmp.eq.s32.totalorder %s17, 1
      %p56 = por %p54, %p55
      %p57 = scmp.ne.s32.totalorder %s48, %s49
      %p58 = scmp.eq.s32.totalorder %s17, 0
      %p59 = por %p57, %p58
      %p60 = scmp.ne.s32.totalorder %s48, %s49
      %p61 = scmp.eq.s32.totalorder %s18, 1
      %p62 = por %p60, %p61
      %p64 = scmp.ne.s32.totalorder %s49, %s63
      %p65 = scmp.eq.s32.totalorder %s18, 0
      %p66 = por %p64, %p65
      %s68 = sadd.s32 %s67, 1
      %p71 = scmp.eq.s32.totalorder %s12, 1
      %p72 = scmp.ne.s32.totalorder %s67, %s69
      %p73 = scmp.eq.s32.totalorder %s12, 0
      %p74 = por %p72, %p73
      %p75 = scmp.ne.s32.totalorder %s67, %s69
      %p76 = scmp.eq.s32.totalorder %s17, 1
      %p77 = por %p75, %p76
      %p78 = scmp.ne.s32.totalorder %s69, %s70
      %p79 = scmp.eq.s32.totalorder %s17, 0
      %p80 = por %p78, %p79
      %p81 = scmp.ne.s32.totalorder %s69, %s70
      %p82 = scmp.eq.s32.totalorder %s18, 1
      %p83 = por %p81, %p82
      %p85 = scmp.ne.s32.totalorder %s70, %s84
      %p86 = scmp.eq.s32.totalorder %s18, 0
      %p87 = por %p85, %p86
      %s89 = sadd.s32 %s88, 1
      %p92 = scmp.eq.s32.totalorder %s12, 1
      %p93 = scmp.ne.s32.totalorder %s88, %s90
      %p94 = scmp.eq.s32.totalorder %s12, 0
      %p95 = por %p93, %p94
      %p96 = scmp.ne.s32.totalorder %s88, %s90
      %p97 = scmp.eq.s32.totalorder %s17, 1
      %p98 = por %p96, %p97
      %p99 = scmp.ne.s32.totalorder %s90, %s91
      %p100 = scmp.eq.s32.totalorder %s17, 0
      %p101 = por %p99, %p100
      %p102 = scmp.ne.s32.totalorder %s90, %s91
      %p103 = scmp.eq.s32.totalorder %s18, 1
      %p104 = por %p102, %p103
      %p106 = scmp.ne.s32.totalorder %s91, %s105
      %p107 = scmp.eq.s32.totalorder %s18, 0
      %p108 = por %p106, %p107
      %s110 = sadd.s32 %s109, 1
      %p113 = scmp.eq.s32.totalorder %s12, 1
      %p114 = scmp.ne.s32.totalorder %s109, %s111
      %p115 = scmp.eq.s32.totalorder %s12, 0
      %p116 = por %p114, %p115
      %p117 = scmp.ne.s32.totalorder %s109, %s111
      %p118 = scmp.eq.s32.totalorder %s17, 1
      %p119 = por %p117, %p118
      %p120 = scmp.ne.s32.totalorder %s111, %s112
      %p121 = scmp.eq.s32.totalorder %s17, 0
      %p122 = por %p120, %p121
      %p123 = scmp.ne.s32.totalorder %s111, %s112
      %p124 = scmp.eq.s32.totalorder %s18, 1
      %p125 = por %p123, %p124
      %p127 = scmp.ne.s32.totalorder %s112, %s126
      %p128 = scmp.eq.s32.totalorder %s18, 0
      %p129 = por %p127, %p128
      %s130 = ssub.s32 %s12, %s19
      %p131 = scmp.eq.s32.totalorder %s130, 0
      %s133 = sadd.s32 %s132, 1
      %s134 = scalar_select %p131, %s132, %s133
      %p137 = pneg %p131
      %p138 = scmp.eq.s32.totalorder %s12, 1
      %p139 = por %p137, %p138
      %p140 = scmp.ne.s32.totalorder %s132, %s135
      %p141 = scmp.eq.s32.totalorder %s12, 0
      %p142 = por %p140, %p141
      %p143 = scmp.ne.s32.totalorder %s132, %s135
      %p144 = scmp.eq.s32.totalorder %s17, 1
      %p145 = por %p143, %p144
      %p146 = scmp.ne.s32.totalorder %s135, %s136
      %p147 = scmp.eq.s32.totalorder %s17, 0
      %p148 = por %p146, %p147
      %p149 = scmp.ne.s32.totalorder %s135, %s136
      %p150 = scmp.eq.s32.totalorder %s18, 1
      %p151 = por %p149, %p150
      %p153 = scmp.ne.s32.totalorder %s136, %s152
      %p154 = scmp.eq.s32.totalorder %s18, 0
      %p155 = por %p153, %p154
      %p156 = scmp.le.s32.totalorder 1, %s12
      %p157 = scmp.lt.s32.totalorder %s12, 3
      %p158 = pnand %p156, %p157
      %p159 = pneg %p158
      // Predicated region
      $region9: #{generic_dnn.1} parent=5 // pred_check
        _
      $region10: #{generic_dnn.1} parent=5 // pred_check_branch
        %161 = sbr.rel (%p158) target = $region12
      $region11: #{generic_dnn.1} parent=5 // pred_region
        %s162 = ssub.s32 %s12, 1
        // Predicated region
        $region13: #{generic_dnn.1} parent=11 // pred_check
          %p163 = pneg %p59
        $region14: #{generic_dnn.1} parent=11 // pred_check_branch
          %165 = sbr.rel (%p163) target = $region16
        $region15: #{generic_dnn.1} parent=11 // pred_region
          _
        $region16: #{generic_dnn.1} parent=11 // pred_fallthru
          _
        // Predicated region
        $region17: #{generic_dnn.1} parent=11 // pred_check
          %p166 = pneg %p80
        $region18: #{generic_dnn.1} parent=11 // pred_check_branch
          %168 = sbr.rel (%p166) target = $region20
        $region19: #{generic_dnn.1} parent=11 // pred_region
          _
        $region20: #{generic_dnn.1} parent=11 // pred_fallthru
          _
        // Predicated region
        $region21: #{generic_dnn.1} parent=11 // pred_check
          %p169 = pneg %p101
        $region22: #{generic_dnn.1} parent=11 // pred_check_branch
          %171 = sbr.rel (%p169) target = $region24
        $region23: #{generic_dnn.1} parent=11 // pred_region
          %173 = vsyncadd [#allocation3], 0
          %s174 = sshll.u32 %s3, 4
          %s175 = int_to_ptr.hbm [resolvable:$true] %s174
          %s176 = sshll.u32 [#allocation2], 4
          %s177 = int_to_ptr.vmem [resolvable:$true] %s176
          %182 = dma.hbm_to_vmem [thread:$0]  %s175, 2048, %s177, [#allocation3], 128, 128, 8
        $region24: #{generic_dnn.1} parent=11 // pred_fallthru
          _
        // Predicated region
        $region25: #{generic_dnn.1} parent=11 // pred_check
          %p183 = pneg %p122
        $region26: #{generic_dnn.1} parent=11 // pred_check_branch
          %185 = sbr.rel (%p183) target = $region28
        $region27: #{generic_dnn.1} parent=11 // pred_region
          _
        $region28: #{generic_dnn.1} parent=11 // pred_fallthru
          _
      $region12: #{generic_dnn.1} parent=5 // pred_fallthru
        _
      %p186 = scmp.lt.s32.totalorder %s12, 2
      // Predicated region
      $region29: #{generic_dnn.1} parent=5 // pred_check
        %p187 = pneg %p186
      $region30: #{generic_dnn.1} parent=5 // pred_check_branch
        %189 = sbr.rel (%p187) target = $region32
      $region31: #{generic_dnn.1} parent=5 // pred_region
        // Predicated region
        $region33: #{generic_dnn.1} parent=31 // pred_check
          %p190 = pneg %p32
        $region34: #{generic_dnn.1} parent=31 // pred_check_branch
          %192 = sbr.rel (%p190) target = $region36
        $region35: #{generic_dnn.1} parent=31 // pred_region
          %s193 = smul.u32 2, %s12
          %p194 = scmp.lt.s32.totalorder %s193, 3
          %s195 = scalar_select %p194, %s193, 3
          %s196 = smul.addr %s195, 8
          %s197 = scalar_lea.vmem %s0, %s196
          %s198 = smul.u32 2, %s12
        $region36: #{generic_dnn.1} parent=31 // pred_fallthru
          _
      $region32: #{generic_dnn.1} parent=5 // pred_fallthru
        _
      %p199 = scmp.le.s32.totalorder 1, %s12
      %p200 = scmp.lt.s32.totalorder %s12, 3
      %p201 = pnand %p199, %p200
      %p202 = pneg %p201
      // Predicated region
      $region37: #{generic_dnn.1} parent=5 // pred_check
        _
      $region38: #{generic_dnn.1} parent=5 // pred_check_branch
        %204 = sbr.rel (%p201) target = $region40
      $region39: #{generic_dnn.1} parent=5 // pred_region
        %s205 = ssub.s32 %s12, 1
        // Predicated region
        $region41: #{generic_dnn.1} parent=39 // pred_check
          %p206 = pneg %p101
        $region42: #{generic_dnn.1} parent=39 // pred_check_branch
          %208 = sbr.rel (%p206) target = $region44
        $region43: #{generic_dnn.1} parent=39 // pred_region
          %210 = dma.done [#allocation3], 2048
        $region44: #{generic_dnn.1} parent=39 // pred_fallthru
          _
        %s211 = smul.u32 2, %s17
        %p212 = scmp.lt.s32.totalorder %s211, 3
        %s213 = scalar_select %p212, %s211, 3
        %s214 = smul.addr %s213, 8
        %s215 = scalar_lea.vmem %s0, %s214
        %p216 = pneg %p38
        %p217 = pneg %p35
        %p218 = pneg %p59
        %p219 = pneg %p56
        %p220 = pneg %p80
        %p221 = pneg %p77
        %p222 = pneg %p101
        %p223 = pneg %p98
        %p224 = pneg %p122
        %p225 = pneg %p119
        %p226 = pneg %p148
        %p227 = pneg %p145
        %s228 = smul.u32 2, %s17
        %p229 = scmp.lt.s32.totalorder %s228, 3
        %s230 = scalar_select %p229, %s228, 3
        %s231 = smul.addr %s230, 8
        %s232 = scalar_lea.vmem %s5, %s231
        %s233 = smul.u32 2, %s17
        %p234 = scmp.lt.s32.totalorder %s233, 3
        %s235 = scalar_select %p234, %s233, 3
        %s236 = smul.addr %s235, 8
        %s237 = scalar_lea.vmem %s0, %s236
        %s238 = smul.u32 2, %s17
        %s239 = smul.u32 2, %s17
        %p240 = scmp.lt.s32.totalorder %s239, 3
        %s241 = scalar_select %p240, %s239, 3
        %s242 = smul.addr %s241, 8
        %s243 = scalar_lea.vmem %s5, %s242
        %s244 = smul.u32 2, %s17
        %v245 = vld [vmem:[%s237] sm:$0xff]
        %v246 = vld [vmem:[%s237 + $0x8] sm:$0xff]
        %v247 = vld [vmem:[%s1] sm:$0xff]
        %v248 = vld [vmem:[%s1 + $0x8] sm:$0xff]
        %v249 = vld [vmem:[%s1 + $0x10] sm:$0xff]
        %v250 = vld [vmem:[%s1 + $0x18] sm:$0xff]
        %v251 = vld [vmem:[%s1 + $0x20] sm:$0xff]
        %v252 = vld [vmem:[%s1 + $0x28] sm:$0xff]
        %v253 = vld [vmem:[%s1 + $0x30] sm:$0xff]
        %v254 = vld [vmem:[%s1 + $0x38] sm:$0xff]
        %v255 = vld [vmem:[%s1 + $0x40] sm:$0xff]
        %v256 = vld [vmem:[%s1 + $0x48] sm:$0xff]
        %v257 = vld [vmem:[%s1 + $0x50] sm:$0xff]
        %v258 = vld [vmem:[%s1 + $0x58] sm:$0xff]
        %v259 = vld [vmem:[%s1 + $0x60] sm:$0xff]
        %v260 = vld [vmem:[%s1 + $0x68] sm:$0xff]
        %v261 = vld [vmem:[%s1 + $0x70] sm:$0xff]
        %v262 = vld [vmem:[%s1 + $0x78] sm:$0xff]
        %v263 = vld [vmem:[%s2] sm:$0x1]
        %v265 = vperm.slane %v263, 0
        %267 = vmatpush.msra.mxu0 %v262
        %268 = vmatpush.msra.mxu0 %v261
        %269 = vmatpush.msra.mxu0 %v260
        %270 = vmatpush.msra.mxu0 %v259
        %271 = vmatpush.msra.mxu0 %v258
        %272 = vmatpush.msra.mxu0 %v257
        %273 = vmatpush.msra.mxu0 %v256
        %274 = vmatpush.msra.mxu0 %v255
        %275 = vmatpush.msra.mxu0 %v254
        %276 = vmatpush.msra.mxu0 %v253
        %277 = vmatpush.msra.mxu0 %v252
        %278 = vmatpush.msra.mxu0 %v251
        %279 = vmatpush.msra.mxu0 %v250
        %280 = vmatpush.msra.mxu0 %v249
        %281 = vmatpush.msra.mxu0 %v248
        %282 = vmatpush.msra.mxu0 %v247
        %283 = vmatmul.f32.gmra.mxu0 %v245
        %v284 = vpop.f32.mrf.mxu0
        %v285 = vadd.f32 %v265, %v284
        %286 = vmatmul.f32.gmra.mxu0 %v246
        %v287 = vpop.f32.mrf.mxu0
        %v288 = vadd.f32 %v265, %v287
        %289 = vdwg.mxu0
        %v290 = vmax.f32 %v285, 0.0
        %v291 = vmax.f32 %v288, 0.0
        %v292 = vand.u32 2147483647, %v285
        %v293 = vand.u32 2147483647, %v288
        %v294 = vsub.f32 0.0, %v292
        %v295 = vsub.f32 0.0, %v293
        %v296 = vmul.f32 %v294, 1.442695
        %v297 = vpow.pop %v296
        %v298 = vmul.f32 %v295, 1.442695
        %v299 = vpow.pop %v298
        %v300 = vadd.f32 %v297, 1.0
        %v301 = vlog2.pop %v300
        %v302 = vmul.f32 %v301, 0.6931472
        %v303 = vmul.f32 -0.5, %v297
        %v304 = vadd.f32 %v303, 1.0
        %v305 = vmul.f32 %v304, %v297
        %v306 = vand.u32 2147483647, %v297
        %vm307 = vcmp.lt.f32.partialorder %v306, 0.0004427343
        %v308 = vsel %vm307, %v305, %v302
        %v309 = vadd.f32 %v299, 1.0
        %v310 = vlog2.pop %v309
        %v311 = vmul.f32 %v310, 0.6931472
        %v312 = vmul.f32 -0.5, %v299
        %v313 = vadd.f32 %v312, 1.0
        %v314 = vmul.f32 %v313, %v299
        %v315 = vand.u32 2147483647, %v299
        %vm316 = vcmp.lt.f32.partialorder %v315, 0.0004427343
        %v317 = vsel %vm316, %v314, %v311
        %v318 = vadd.f32 %v290, %v308
        %v319 = vadd.f32 %v291, %v317
        %v320 = vadd.f32 %v318, %v245
        %v321 = vadd.f32 %v319, %v246
        %v322 = vld [vmem:[#allocation2] sm:$0xff]
        %v323 = vld [vmem:[#allocation2 + $0x8] sm:$0xff]
        %v324 = vld [vmem:[#allocation2 + $0x10] sm:$0xff]
        %v325 = vld [vmem:[#allocation2 + $0x18] sm:$0xff]
        %v326 = vld [vmem:[#allocation2 + $0x20] sm:$0xff]
        %v327 = vld [vmem:[#allocation2 + $0x28] sm:$0xff]
        %v328 = vld [vmem:[#allocation2 + $0x30] sm:$0xff]
        %v329 = vld [vmem:[#allocation2 + $0x38] sm:$0xff]
        %v330 = vld [vmem:[#allocation2 + $0x40] sm:$0xff]
        %v331 = vld [vmem:[#allocation2 + $0x48] sm:$0xff]
        %v332 = vld [vmem:[#allocation2 + $0x50] sm:$0xff]
        %v333 = vld [vmem:[#allocation2 + $0x58] sm:$0xff]
        %v334 = vld [vmem:[#allocation2 + $0x60] sm:$0xff]
        %v335 = vld [vmem:[#allocation2 + $0x68] sm:$0xff]
        %v336 = vld [vmem:[#allocation2 + $0x70] sm:$0xff]
        %v337 = vld [vmem:[#allocation2 + $0x78] sm:$0xff]
        %v338 = vld [vmem:[%s4] sm:$0x1]
        %v340 = vperm.slane %v338, 0
        %342 = vmatpush.msra.mxu0 %v337
        %343 = vmatpush.msra.mxu0 %v336
        %344 = vmatpush.msra.mxu0 %v335
        %345 = vmatpush.msra.mxu0 %v334
        %346 = vmatpush.msra.mxu0 %v333
        %347 = vmatpush.msra.mxu0 %v332
        %348 = vmatpush.msra.mxu0 %v331
        %349 = vmatpush.msra.mxu0 %v330
        %350 = vmatpush.msra.mxu0 %v329
        %351 = vmatpush.msra.mxu0 %v328
        %352 = vmatpush.msra.mxu0 %v327
        %353 = vmatpush.msra.mxu0 %v326
        %354 = vmatpush.msra.mxu0 %v325
        %355 = vmatpush.msra.mxu0 %v324
        %356 = vmatpush.msra.mxu0 %v323
        %357 = vmatpush.msra.mxu0 %v322
        %358 = vmatmul.f32.gmra.mxu0 %v320
        %v359 = vpop.f32.mrf.mxu0
        %v360 = vadd.f32 %v340, %v359
        %361 = vmatmul.f32.gmra.mxu0 %v321
        %v362 = vpop.f32.mrf.mxu0
        %v363 = vadd.f32 %v340, %v362
        %364 = vdwg.mxu0
        %365 = vst [vmem:[%s243] sm:$0xff] %v360
        %366 = vst [vmem:[%s243 + $0x8] sm:$0xff] %v363
        %s367 = smul.u32 2, %s17
        %p368 = scmp.lt.s32.totalorder %s367, 3
        %s369 = scalar_select %p368, %s367, 3
        %s370 = smul.addr %s369, 8
        %s371 = scalar_lea.vmem %s5, %s370
        // Predicated region
        $region45: #{generic_dnn.1} parent=39 // pred_check
          %p372 = pneg %p145
        $region46: #{generic_dnn.1} parent=39 // pred_check_branch
          %374 = sbr.rel (%p372) target = $region48
        $region47: #{generic_dnn.1} parent=39 // pred_region
          %s375 = smul.u32 2, %s17
        $region48: #{generic_dnn.1} parent=39 // pred_fallthru
          _
      $region40: #{generic_dnn.1} parent=5 // pred_fallthru
        _
      %p376 = scmp.le.s32.totalorder 2, %s12
      // Predicated region
      $region49: #{generic_dnn.1} parent=5 // pred_check
        %p377 = pneg %p376
      $region50: #{generic_dnn.1} parent=5 // pred_check_branch
        %379 = sbr.rel (%p377) target = $region52
      $region51: #{generic_dnn.1} parent=5 // pred_region
        %s380 = ssub.s32 %s12, 2
        // Predicated region
        $region53: #{generic_dnn.1} parent=51 // pred_check
          %p381 = pneg %p151
        $region54: #{generic_dnn.1} parent=51 // pred_check_branch
          %383 = sbr.rel (%p381) target = $region56
        $region55: #{generic_dnn.1} parent=51 // pred_region
          %s384 = smul.u32 2, %s18
          %p385 = scmp.lt.s32.totalorder %s384, 3
          %s386 = scalar_select %p385, %s384, 3
          %s387 = smul.addr %s386, 8
          %s388 = scalar_lea.vmem %s5, %s387
        $region56: #{generic_dnn.1} parent=51 // pred_fallthru
          _
      $region52: #{generic_dnn.1} parent=5 // pred_fallthru
        _
    $region6: #{generic_dnn.1} parent=1 // loop_footer
      %s16 = sadd.s32 1, %s12
    $region7: #{generic_dnn.1} parent=1 // loop_footer_branch
      %11 = sbr.rel target = $region3
    $region8: #{generic_dnn.1} parent=1 // loop_exit
      _
    %389 = vsyncpa [#allocation3], 1
    %s390 = scalar_lea.sflag [#allocation3], 1
    %391 = vsyncpa %s390, 1

</llo_original>
